<compile_context>
chip_gen: v6e
topology: v6e:2x2x1
jax: 0.10.0
libtpu: 0.0.40
codegen_flags: <defaults>
</compile_context>

<pallas_src>
import functools

import jax
import jax.numpy as jnp
from jax import lax
from jax.experimental import pallas as pl
from jax.experimental.pallas import tpu as pltpu

EPS = 1e-5


def _cdiv(a: int, b: int) -> int:
    return -(-a // b)


def _round_up(a: int, b: int) -> int:
    return _cdiv(a, b) * b


def _vmem_cap_bytes() -> int:
    """Physical VMEM with ~25% headroom; conservative v7x fallback."""
    phys = 64 * 1024 * 1024
    get_info = getattr(pltpu, "get_tpu_info", None)
    if get_info is not None:
        try:
            cap = int(getattr(get_info(), "vmem_capacity_bytes", 0))
            if cap > 0:
                phys = cap
        except Exception:
            pass
    return (phys * 3) // 4


def _prenorm_linear_kernel(x_ref, w_ref, b_ref, o_ref, norm_ref):
    """Fused LayerNorm (affine pre-folded into W/b) + Linear.

    x_ref:    [TN, D]     input rows for this row tile (resident across j)
    w_ref:    [D, TOUT]   folded weight column block  (gamma folded in)
    b_ref:    [1, TOUT]   folded bias column block    (f32; beta@W + b)
    o_ref:    [TN, TOUT]  output tile
    norm_ref: [TN, D]     VMEM scratch holding the normalized row tile,
                          already cast to the MXU operand dtype.
    """
    # LayerNorm only once per row tile (j == 0), reused for every column block.
    @pl.when(pl.program_id(1) == 0)
    def _():
        x = x_ref[...].astype(jnp.float32)
        # Single-pass stats: the two lane reductions are independent
        # (no serialized center -> reduce chain).
        mean = jnp.mean(x, axis=-1, keepdims=True)
        mean_sq = jnp.mean(x * x, axis=-1, keepdims=True)
        var = jnp.maximum(mean_sq - mean * mean, 0.0)
        inv = lax.rsqrt(var + EPS)
        norm_ref[...] = ((x - mean) * inv).astype(norm_ref.dtype)

    # MXU matmul in the weight dtype, f32 accumulation.
    y = jnp.dot(norm_ref[...], w_ref[...], preferred_element_type=jnp.float32)
    y = y + b_ref[...]  # bias already f32
    o_ref[...] = y.astype(o_ref.dtype)


@functools.partial(jax.jit, static_argnames=("block_rows", "block_cols"))
def prenorm_linear(x, gamma, beta, w, b, *, block_rows=None, block_cols=None):
    """x: [B, S, D]; returns Linear(LayerNorm(x)) with Linear weight w:[D,D] (in,out)."""
    B, S, D = x.shape
    N = B * S

    itemsize = jnp.dtype(x.dtype).itemsize
    w_itemsize = jnp.dtype(w.dtype).itemsize
    out_itemsize = itemsize  # output dtype == input dtype

    # ---- Fold the LayerNorm affine into the Linear params (f32, O(D^2)). ----
    gamma_f = gamma.astype(jnp.float32)
    beta_f = beta.astype(jnp.float32)
    w_f32 = w.astype(jnp.float32)
    w_fold = (gamma_f[:, None] * w_f32).astype(w.dtype)          # [D, D]
    b_fold = (beta_f @ w_f32 + b.astype(jnp.float32)).reshape(1, D)  # f32 [1, D]

    x2d = x.reshape(N, D)

    # ---- Row tile: adaptive to D, aligned to sublane packing. ----
    row_align = 16 if itemsize == 2 else 8
    if block_rows is not None:
        tn = int(block_rows)
    else:
        # Target ~4 MiB of streamed input bytes per grid step.
        tn = max(row_align, (4 << 20) // (D * itemsize))
        # Keep at least 2 row steps when N allows (megacore balance on v7x).
        tn = min(tn, _round_up(_cdiv(N, 2), row_align))
    tn = max(row_align, (tn // row_align) * row_align)
    tn = min(tn, _round_up(N, row_align))

    # ---- Column tile over the output features. ----
    if block_cols is not None:
        t_out = int(block_cols)
    else:
        t_out = D if D <= 1024 else 512
    t_out = min(t_out, D)
    if t_out != D and (D % 128 != 0 or t_out % 128 != 0):
        t_out = D  # partial-width column blocks need lane (128) alignment

    # ---- VMEM budget (incl. in-kernel f32 temporaries); shrink tn if needed. ----
    def _budget(tn_):
        in_tile = tn_ * D * itemsize            # x tile
        out_tile = tn_ * t_out * out_itemsize   # out tile
        w_tile = D * t_out * w_itemsize
        b_tile = t_out * 4
        scratch = tn_ * D * w_itemsize          # normalized tile
        f32_tmp = 4 * tn_ * D * 4 + tn_ * t_out * 4  # LN temporaries + f32 acc
        return 2 * (in_tile + out_tile) + 2 * (w_tile + b_tile) + scratch + f32_tmp

    cap = _vmem_cap_bytes()
    while _budget(tn) > cap and tn > row_align:
        tn = max(row_align, ((tn // 2) // row_align) * row_align)

    vmem_limit = int(min(cap, max(32 * 1024 * 1024, int(_budget(tn) * 1.25))))

    nr = _cdiv(N, tn)
    nc = _cdiv(D, t_out)

    w_bytes = (nr if nc > 1 else 1) * D * D * w_itemsize
    cost = pl.CostEstimate(
        flops=2 * N * D * D + 8 * N * D,
        transcendentals=N,  # one rsqrt per row
        bytes_accessed=N * D * itemsize + N * D * out_itemsize + w_bytes + D * 4,
    )

    out2d = pl.pallas_call(
        _prenorm_linear_kernel,
        out_shape=jax.ShapeDtypeStruct((N, D), x.dtype),
        grid=(nr, nc),
        in_specs=[
            pl.BlockSpec((tn, D), lambda i, j: (i, 0)),      # streamed rows
            pl.BlockSpec((D, t_out), lambda i, j: (0, j)),   # folded W column block
            pl.BlockSpec((1, t_out), lambda i, j: (0, j)),   # folded bias (f32)
        ],
        out_specs=pl.BlockSpec((tn, t_out), lambda i, j: (i, j)),
        scratch_shapes=[pltpu.VMEM((tn, D), w.dtype)],       # normalized row tile
        compiler_params=pltpu.CompilerParams(
            dimension_semantics=("parallel", "arbitrary"),
            vmem_limit_bytes=vmem_limit,
        ),
        cost_estimate=cost,
    )(x2d, w_fold, b_fold)

    return out2d.reshape(B, S, D)


def _reference(x, gamma, beta, w, b):
    """Pure-JAX (f32 math) reference for PreNorm with an inner Linear layer."""
    xf = x.astype(jnp.float32)
    mean = jnp.mean(xf, axis=-1, keepdims=True)
    var = jnp.mean((xf - mean) ** 2, axis=-1, keepdims=True)
    normed = (xf - mean) * lax.rsqrt(var + EPS)
    normed = normed * gamma.astype(jnp.float32) + beta.astype(jnp.float32)
    y = normed @ w.astype(jnp.float32) + b.astype(jnp.float32)
    return y.astype(x.dtype)


if __name__ == "__main__":
    key = jax.random.PRNGKey(0)
    B, S, D = 2, 8, 128  # batch, sequence, embedding_dim (lane-dense D)

    kx, kw, kb, kg, kbt = jax.random.split(key, 5)
    x = jax.random.normal(kx, (B, S, D), dtype=jnp.float32)
    gamma = 1.0 + 0.1 * jax.random.normal(kg, (D,), dtype=jnp.float32)
    beta = 0.1 * jax.random.normal(kbt, (D,), dtype=jnp.float32)
    w = jax.random.normal(kw, (D, D), dtype=jnp.float32) / jnp.sqrt(D)
    b = 0.01 * jax.random.normal(kb, (D,), dtype=jnp.float32)

    # --- f32 path (auto row tiling: multi-step row grid at this shape) ---
    out = jax.block_until_ready(prenorm_linear(x, gamma, beta, w, b))
    ref = _reference(x, gamma, beta, w, b)
    assert out.shape == (B, S, D)
    assert jnp.allclose(out, ref, atol=2e-3, rtol=2e-3), "f32 mismatch vs reference"

    # --- bf16 path (bf16 MXU operands, f32 LN stats + f32 accumulation) ---
    x_bf = x.astype(jnp.bfloat16)
    w_bf = w.astype(jnp.bfloat16)
    b_bf = b.astype(jnp.bfloat16)
    out_bf = jax.block_until_ready(prenorm_linear(x_bf, gamma, beta, w_bf, b_bf))
    ref_bf = _reference(x_bf, gamma, beta, w_bf, b_bf)
    assert out_bf.shape == (B, S, D)
    assert jnp.allclose(out_bf.astype(jnp.float32), ref_bf.astype(jnp.float32),
                        atol=8e-2, rtol=8e-2), "bf16 mismatch vs reference"

    # --- column-blocked W + ragged (masked) last row block, no host pad/slice ---
    B2, S2, D2 = 2, 12, 256  # N=24 not divisible by block_rows=16; nc=2
    k2x, k2w, k2b, k2g, k2bt = jax.random.split(jax.random.PRNGKey(1), 5)
    x2 = jax.random.normal(k2x, (B2, S2, D2), dtype=jnp.float32)
    g2 = 1.0 + 0.1 * jax.random.normal(k2g, (D2,), dtype=jnp.float32)
    bt2 = 0.1 * jax.random.normal(k2bt, (D2,), dtype=jnp.float32)
    w2 = jax.random.normal(k2w, (D2, D2), dtype=jnp.float32) / jnp.sqrt(D2)
    b2 = 0.01 * jax.random.normal(k2b, (D2,), dtype=jnp.float32)
    out2 = jax.block_until_ready(
        prenorm_linear(x2, g2, bt2, w2, b2, block_rows=16, block_cols=128))
    ref2 = _reference(x2, g2, bt2, w2, b2)
    assert out2.shape == (B2, S2, D2)
    assert jnp.allclose(out2, ref2, atol=2e-3, rtol=2e-3), "col-blocked mismatch"

    print("KERNEL_OK")
</pallas_src>

<mosaic_0001>
module attributes {stable_mosaic.version = 11 : i64} {
  func.func @_prenorm_linear_kernel(%arg0: i32, %arg1: i32, %arg2: memref<8x128xf32, #tpu.memory_space<vmem>>, %arg3: memref<128x128xf32, #tpu.memory_space<vmem>>, %arg4: memref<1x128xf32, #tpu.memory_space<vmem>>, %arg5: memref<8x128xf32, #tpu.memory_space<vmem>>, %arg6: memref<8x128xf32, #tpu.memory_space<vmem>>) attributes {dimension_semantics = [#tpu.dimension_semantics<parallel>, #tpu.dimension_semantics<arbitrary>], iteration_bounds = array<i64: 2, 1>, scalar_prefetch = 0 : i64, scratch_operands = 1 : i64, tpu.core_type = #tpu.core_type<tc>, window_params = [{transform_indices = @transform_0, window_bounds = array<i64: 8, 128>}, {transform_indices = @transform_1, window_bounds = array<i64: 128, 128>}, {transform_indices = @transform_2, window_bounds = array<i64: 1, 128>}, {transform_indices = @transform_3, window_bounds = array<i64: 8, 128>}]} {
    %c0_i32 = arith.constant 0 : i32
    %0 = arith.cmpi eq, %arg1, %c0_i32 : i32
    %1 = arith.extui %0 : i1 to i32
    %c0_i32_0 = arith.constant 0 : i32
    %2 = arith.cmpi ne, %1, %c0_i32_0 : i32
    scf.if %2 {
      %c0_8 = arith.constant 0 : index
      %c0_9 = arith.constant 0 : index
      %10 = vector.load %arg2[%c0_8, %c0_9] : memref<8x128xf32, #tpu.memory_space<vmem>>, vector<8x128xf32>
      %cst_10 = arith.constant dense<0.000000e+00> : vector<8xf32>
      %11 = vector.multi_reduction <add>, %10, %cst_10 [1] : vector<8x128xf32> to vector<8xf32>
      %12 = vector.shape_cast %11 : vector<8xf32> to vector<8x1xf32>
      %cst_11 = arith.constant 1.280000e+02 : f32
      %13 = vector.broadcast %cst_11 : f32 to vector<8x1xf32>
      %14 = arith.divf %12, %13 : vector<8x1xf32>
      %15 = arith.mulf %10, %10 : vector<8x128xf32>
      %cst_12 = arith.constant dense<0.000000e+00> : vector<8xf32>
      %16 = vector.multi_reduction <add>, %15, %cst_12 [1] : vector<8x128xf32> to vector<8xf32>
      %17 = vector.shape_cast %16 : vector<8xf32> to vector<8x1xf32>
      %cst_13 = arith.constant 1.280000e+02 : f32
      %18 = vector.broadcast %cst_13 : f32 to vector<8x1xf32>
      %19 = arith.divf %17, %18 : vector<8x1xf32>
      %20 = arith.mulf %14, %14 : vector<8x1xf32>
      %21 = arith.subf %19, %20 : vector<8x1xf32>
      %cst_14 = arith.constant 0.000000e+00 : f32
      %22 = vector.broadcast %cst_14 : f32 to vector<8x1xf32>
      %23 = arith.maximumf %21, %22 : vector<8x1xf32>
      %cst_15 = arith.constant 9.99999974E-6 : f32
      %24 = vector.broadcast %cst_15 : f32 to vector<8x1xf32>
      %25 = arith.addf %23, %24 : vector<8x1xf32>
      %26 = math.rsqrt %25 : vector<8x1xf32>
      %27 = vector.broadcast %14 : vector<8x1xf32> to vector<8x128xf32>
      %28 = arith.subf %10, %27 : vector<8x128xf32>
      %29 = vector.broadcast %26 : vector<8x1xf32> to vector<8x128xf32>
      %30 = arith.mulf %28, %29 : vector<8x128xf32>
      %c0_16 = arith.constant 0 : index
      %c0_17 = arith.constant 0 : index
      %31 = vector.load %arg6[%c0_16, %c0_17] : memref<8x128xf32, #tpu.memory_space<vmem>>, vector<8x128xf32>
      tpu.vector_store %arg6[%c0_16, %c0_17], %30 {strides = array<i32>} : memref<8x128xf32, #tpu.memory_space<vmem>>, vector<8x128xf32>,
    } else {
    }
    %c0 = arith.constant 0 : index
    %c0_1 = arith.constant 0 : index
    %3 = vector.load %arg6[%c0, %c0_1] : memref<8x128xf32, #tpu.memory_space<vmem>>, vector<8x128xf32>
    %c0_2 = arith.constant 0 : index
    %c0_3 = arith.constant 0 : index
    %4 = vector.load %arg3[%c0_2, %c0_3] : memref<128x128xf32, #tpu.memory_space<vmem>>, vector<128x128xf32>
    %cst = arith.constant dense<0.000000e+00> : vector<8x128xf32>
    %5 = tpu.matmul %3, %4, %cst {dimension_numbers = #tpu.dot_dimension_numbers<[1], [0], [0], [1], [0, 0, 1, 1], [], []>} : vector<8x128xf32>, vector<128x128xf32>, vector<8x128xf32> -> vector<8x128xf32>
    %c0_4 = arith.constant 0 : index
    %c0_5 = arith.constant 0 : index
    %6 = vector.load %arg4[%c0_4, %c0_5] : memref<1x128xf32, #tpu.memory_space<vmem>>, vector<1x128xf32>
    %7 = vector.broadcast %6 : vector<1x128xf32> to vector<8x128xf32>
    %8 = arith.addf %5, %7 : vector<8x128xf32>
    %c0_6 = arith.constant 0 : index
    %c0_7 = arith.constant 0 : index
    %9 = vector.load %arg5[%c0_6, %c0_7] : memref<8x128xf32, #tpu.memory_space<vmem>>, vector<8x128xf32>
    tpu.vector_store %arg5[%c0_6, %c0_7], %8 {strides = array<i32>} : memref<8x128xf32, #tpu.memory_space<vmem>>, vector<8x128xf32>,
    return
  }
  func.func @transform_0(%arg0: i32, %arg1: i32) -> (i32, i32) {
    %c0_i32 = arith.constant 0 : i32
    %c0_i32_0 = arith.constant 0 : i32
    return %arg0, %c0_i32 : i32, i32
  }
  func.func @transform_1(%arg0: i32, %arg1: i32) -> (i32, i32) {
    %c0_i32 = arith.constant 0 : i32
    %c0_i32_0 = arith.constant 0 : i32
    return %c0_i32, %arg1 : i32, i32
  }
  func.func @transform_2(%arg0: i32, %arg1: i32) -> (i32, i32) {
    %c0_i32 = arith.constant 0 : i32
    %c0_i32_0 = arith.constant 0 : i32
    return %c0_i32, %arg1 : i32, i32
  }
  func.func @transform_3(%arg0: i32, %arg1: i32) -> (i32, i32) {
    %c0_i32 = arith.constant 0 : i32
    return %arg0, %arg1 : i32, i32
  }
}

</mosaic_0001>

<llo_original>
// kernel: prenorm_linear.1
$region0: #{prenorm_linear.1}
  #allocation0 [shape = 'u32[]', space=smem, size = 0x4, offset = 0x4, fixed_abs, tag = 'smem constant byte address 0x4 - core index']
  #allocation1 [shape = 'u32[144,128]{1,0:T(1,128)}', space=vmem, size = 0x12000, scoped, tag = 'internal scratch']
  #allocation2 [shape = 'f32[8,128]{1,0:T(8,128)}', space=vmem, size = 0x1000, scoped, tag = 'scratch operand']
  %s0 = inlined_call_operand.vmem [shape: f32[16,128], index: 0, kind: input, shape index: {}]
  %s1 = inlined_call_operand.vmem [shape: f32[128,128], index: 1, kind: input, shape index: {}]
  %s2 = inlined_call_operand.vmem [shape: f32[1,128], index: 2, kind: input, shape index: {}]
  %s3 = inlined_call_operand.hbm [shape: f32[16,128], index: 3, kind: output, shape index: {}]
  %s4 = sld [smem:[#allocation0]]
  $region49: #{prenorm_linear.1} parent=0
    _
  %s6 = ssub.s32 1, %s4
  %s7 = scalar_select 0, %s6, %s4
  $region1: #{prenorm_linear.1} parent=0
    #allocation3 [shape = 'u8[8192]{0}', space=vmem, size = 0x2000, scoped, tag = 'output window, operand 0']
    #allocation4 [shape = 's32[2]{0}', space=sflag, size = 0x8, scoped, tag = 'scoped memory for prenorm_linear.1']
    %8 = vsyncpa [#allocation4], 0
    %s9 = scalar_lea.sflag [#allocation4], 1
    %10 = vsyncpa %s9, 0
    loop: start=0, step=1, limit=4
    $region2: #{prenorm_linear.1} parent=1 // loop_pre_header
      _
    $region3: #{prenorm_linear.1} parent=1 // loop_header
      %s12 = sphi 0, %s16
      %p13 = scmp.ge.s32.totalorder %s12, 4
      %s19 = sphi 0, %s31
      %s20 = sphi 0, %s27
      %s21 = sphi 0, %s19
      %s22 = sphi 0, %s20
      %s23 = sphi 0, %s21
      %s24 = sphi 0, %s22
      %s34 = sphi 0, %s36
      %s37 = sphi 0, %s34
      %s38 = sphi 0, %s37
      %s54 = sphi 0, %s38
      %s60 = sphi 0, %s62
      %s63 = sphi 0, %s60
      %s64 = sphi 0, %s63
      %s80 = sphi 0, %s64
      %s86 = sphi 0, %s88
      %s89 = sphi 0, %s86
      %s90 = sphi 0, %s89
      %s106 = sphi 0, %s90
      %s114 = sphi 0, %s116
      %s117 = sphi 0, %s114
      %s118 = sphi 0, %s117
      %s134 = sphi 0, %s118
    $region4: #{prenorm_linear.1} parent=1 // loop_header_branch
      %15 = sbr.rel (%p13) target = $region8
    $region5: #{prenorm_linear.1} parent=1 // loop_body
      %s17 = ssub.s32 %s12, 1
      %s18 = ssub.s32 %s12, 2
      %s25 = sadd.s32 1, %s20
      %p26 = scmp.ge.s32.totalorder %s25, 1
      %s27 = scalar_select %p26, 0, %s25
      %s28 = sadd.s32 1, %s19
      %s29 = scalar_select %p26, %s28, %s19
      %p30 = scmp.ge.s32.totalorder %s29, 2
      %s31 = scalar_select %p30, 0, %s29
      %s32 = ssub.s32 %s19, %s31
      %p33 = scmp.eq.s32.totalorder %s32, 0
      %s35 = sadd.s32 %s34, 1
      %s36 = scalar_select %p33, %s34, %s35
      %p39 = pneg %p33
      %p40 = scmp.eq.s32.totalorder %s12, 1
      %p41 = por %p39, %p40
      %p42 = scmp.ne.s32.totalorder %s34, %s37
      %p43 = scmp.eq.s32.totalorder %s12, 0
      %p44 = por %p42, %p43
      %p45 = scmp.ne.s32.totalorder %s34, %s37
      %p46 = scmp.eq.s32.totalorder %s17, 1
      %p47 = por %p45, %p46
      %p48 = scmp.ne.s32.totalorder %s37, %s38
      %p49 = scmp.eq.s32.totalorder %s17, 0
      %p50 = por %p48, %p49
      %p51 = scmp.ne.s32.totalorder %s37, %s38
      %p52 = scmp.eq.s32.totalorder %s18, 1
      %p53 = por %p51, %p52
      %p55 = scmp.ne.s32.totalorder %s38, %s54
      %p56 = scmp.eq.s32.totalorder %s18, 0
      %p57 = por %p55, %p56
      %s58 = ssub.s32 %s20, %s27
      %p59 = scmp.eq.s32.totalorder %s58, 0
      %s61 = sadd.s32 %s60, 1
      %s62 = scalar_select %p59, %s60, %s61
      %p65 = pneg %p59
      %p66 = scmp.eq.s32.totalorder %s12, 1
      %p67 = por %p65, %p66
      %p68 = scmp.ne.s32.totalorder %s60, %s63
      %p69 = scmp.eq.s32.totalorder %s12, 0
      %p70 = por %p68, %p69
      %p71 = scmp.ne.s32.totalorder %s60, %s63
      %p72 = scmp.eq.s32.totalorder %s17, 1
      %p73 = por %p71, %p72
      %p74 = scmp.ne.s32.totalorder %s63, %s64
      %p75 = scmp.eq.s32.totalorder %s17, 0
      %p76 = por %p74, %p75
      %p77 = scmp.ne.s32.totalorder %s63, %s64
      %p78 = scmp.eq.s32.totalorder %s18, 1
      %p79 = por %p77, %p78
      %p81 = scmp.ne.s32.totalorder %s64, %s80
      %p82 = scmp.eq.s32.totalorder %s18, 0
      %p83 = por %p81, %p82
      %s84 = ssub.s32 %s20, %s27
      %p85 = scmp.eq.s32.totalorder %s84, 0
      %s87 = sadd.s32 %s86, 1
      %s88 = scalar_select %p85, %s86, %s87
      %p91 = pneg %p85
      %p92 = scmp.eq.s32.totalorder %s12, 1
      %p93 = por %p91, %p92
      %p94 = scmp.ne.s32.totalorder %s86, %s89
      %p95 = scmp.eq.s32.totalorder %s12, 0
      %p96 = por %p94, %p95
      %p97 = scmp.ne.s32.totalorder %s86, %s89
      %p98 = scmp.eq.s32.totalorder %s17, 1
      %p99 = por %p97, %p98
      %p100 = scmp.ne.s32.totalorder %s89, %s90
      %p101 = scmp.eq.s32.totalorder %s17, 0
      %p102 = por %p100, %p101
      %p103 = scmp.ne.s32.totalorder %s89, %s90
      %p104 = scmp.eq.s32.totalorder %s18, 1
      %p105 = por %p103, %p104
      %p107 = scmp.ne.s32.totalorder %s90, %s106
      %p108 = scmp.eq.s32.totalorder %s18, 0
      %p109 = por %p107, %p108
      %s110 = ssub.s32 %s19, %s31
      %s111 = ssub.s32 %s20, %s27
      %s112 = sor.u32 %s110, %s111
      %p113 = scmp.eq.s32.totalorder %s112, 0
      %s115 = sadd.s32 %s114, 1
      %s116 = scalar_select %p113, %s114, %s115
      %p119 = pneg %p113
      %p120 = scmp.eq.s32.totalorder %s12, 1
      %p121 = por %p119, %p120
      %p122 = scmp.ne.s32.totalorder %s114, %s117
      %p123 = scmp.eq.s32.totalorder %s12, 0
      %p124 = por %p122, %p123
      %p125 = scmp.ne.s32.totalorder %s114, %s117
      %p126 = scmp.eq.s32.totalorder %s17, 1
      %p127 = por %p125, %p126
      %p128 = scmp.ne.s32.totalorder %s117, %s118
      %p129 = scmp.eq.s32.totalorder %s17, 0
      %p130 = por %p128, %p129
      %p131 = scmp.ne.s32.totalorder %s117, %s118
      %p132 = scmp.eq.s32.totalorder %s18, 1
      %p133 = por %p131, %p132
      %p135 = scmp.ne.s32.totalorder %s118, %s134
      %p136 = scmp.eq.s32.totalorder %s18, 0
      %p137 = por %p135, %p136
      %p138 = scmp.le.s32.totalorder 1, %s12
      %p139 = scmp.lt.s32.totalorder %s12, 3
      %p140 = pnand %p138, %p139
      %p141 = pneg %p140
      // Predicated region
      $region9: #{prenorm_linear.1} parent=5 // pred_check
        _
      $region10: #{prenorm_linear.1} parent=5 // pred_check_branch
        %143 = sbr.rel (%p140) target = $region12
      $region11: #{prenorm_linear.1} parent=5 // pred_region
        %s144 = ssub.s32 %s12, 1
        // Predicated region
        $region13: #{prenorm_linear.1} parent=11 // pred_check
          %p145 = pneg %p76
        $region14: #{prenorm_linear.1} parent=11 // pred_check_branch
          %147 = sbr.rel (%p145) target = $region16
        $region15: #{prenorm_linear.1} parent=11 // pred_region
          %p148 = scmp.lt.s32.totalorder %s22, 0
          %s149 = scalar_select %p148, %s22, 0
          %s150 = smul.addr %s149, 8
          %s151 = scalar_lea.vmem %s1, %s150
        $region16: #{prenorm_linear.1} parent=11 // pred_fallthru
          _
        // Predicated region
        $region17: #{prenorm_linear.1} parent=11 // pred_check
          %p152 = pneg %p102
        $region18: #{prenorm_linear.1} parent=11 // pred_check_branch
          %154 = sbr.rel (%p152) target = $region20
        $region19: #{prenorm_linear.1} parent=11 // pred_region
          %p155 = scmp.lt.s32.totalorder %s22, 0
          %s156 = scalar_select %p155, %s22, 0
          %s157 = scalar_lea.vmem %s2, %s156
        $region20: #{prenorm_linear.1} parent=11 // pred_fallthru
          _
      $region12: #{prenorm_linear.1} parent=5 // pred_fallthru
        _
      %p158 = scmp.lt.s32.totalorder %s12, 2
      // Predicated region
      $region21: #{prenorm_linear.1} parent=5 // pred_check
        %p159 = pneg %p158
      $region22: #{prenorm_linear.1} parent=5 // pred_check_branch
        %161 = sbr.rel (%p159) target = $region24
      $region23: #{prenorm_linear.1} parent=5 // pred_region
        // Predicated region
        $region25: #{prenorm_linear.1} parent=23 // pred_check
          %p162 = pneg %p44
        $region26: #{prenorm_linear.1} parent=23 // pred_check_branch
          %164 = sbr.rel (%p162) target = $region28
        $region27: #{prenorm_linear.1} parent=23 // pred_region
          %p165 = scmp.lt.s32.totalorder %s19, 1
          %s166 = scalar_select %p165, %s19, 1
          %s167 = smul.addr %s166, 8
          %s168 = scalar_lea.vmem %s0, %s167
        $region28: #{prenorm_linear.1} parent=23 // pred_fallthru
          _
      $region24: #{prenorm_linear.1} parent=5 // pred_fallthru
        _
      %p169 = scmp.le.s32.totalorder 1, %s12
      %p170 = scmp.lt.s32.totalorder %s12, 3
      %p171 = pnand %p169, %p170
      %p172 = pneg %p171
      // Predicated region
      $region29: #{prenorm_linear.1} parent=5 // pred_check
        _
      $region30: #{prenorm_linear.1} parent=5 // pred_check_branch
        %174 = sbr.rel (%p171) target = $region32
      $region31: #{prenorm_linear.1} parent=5 // pred_region
        %s175 = ssub.s32 %s12, 1
        %p176 = scmp.lt.s32.totalorder %s21, 1
        %s177 = scalar_select %p176, %s21, 1
        %s178 = smul.addr %s177, 8
        %s179 = scalar_lea.vmem %s0, %s178
        %p180 = pneg %p50
        %p181 = pneg %p47
        %p182 = scmp.lt.s32.totalorder %s22, 0
        %s183 = scalar_select %p182, %s22, 0
        %s184 = smul.addr %s183, 8
        %s185 = scalar_lea.vmem %s1, %s184
        %p186 = pneg %p76
        %p187 = pneg %p73
        %p188 = scmp.lt.s32.totalorder %s22, 0
        %s189 = scalar_select %p188, %s22, 0
        %s190 = scalar_lea.vmem %s2, %s189
        %p191 = pneg %p102
        %p192 = pneg %p99
        %p193 = pneg %p130
        %p194 = pneg %p127
        %s195 = sand.u32 %s117, 1
        %s196 = scalar_lea.sflag [#allocation4], %s195
        %s197 = sand.u32 %s117, 1
        %s198 = smul.addr %s197, 8
        %s199 = scalar_lea.vmem [#allocation3], %s198
        %p200 = scmp.lt.s32.totalorder %s21, 1
        %s201 = scalar_select %p200, %s21, 1
        %s202 = smul.addr %s201, 8
        %s203 = scalar_lea.vmem %s0, %s202
        %p204 = scmp.lt.s32.totalorder %s22, 0
        %s205 = scalar_select %p204, %s22, 0
        %s206 = smul.addr %s205, 8
        %s207 = scalar_lea.vmem %s1, %s206
        %p208 = scmp.lt.s32.totalorder %s22, 0
        %s209 = scalar_select %p208, %s22, 0
        %s210 = scalar_lea.vmem %s2, %s209
        %p211 = scmp.eq.s32.totalorder %s22, 0
        // Predicated region
        $region33: #{prenorm_linear.1} parent=31 // pred_check
          %p212 = pneg %p211
        $region34: #{prenorm_linear.1} parent=31 // pred_check_branch
          %214 = sbr.rel (%p212) target = $region36
        $region35: #{prenorm_linear.1} parent=31 // pred_region
          %v215 = vld [vmem:[%s203] sm:$0xff]
          %216 = vadd.xlane.f32.xlu0 %v215
          %v217 = vpop.xlane.xlu0 %216
          %v218 = vrcp.pop 128.0
          %v219 = vmul.f32 %v217, %v218
          %v220 = vmul.f32 %v215, %v215
          %221 = vadd.xlane.f32.xlu0 %v220
          %v222 = vpop.xlane.xlu0 %221
          %v223 = vmul.f32 %v222, %v218
          %v224 = vmul.f32 %v219, %v219
          %v225 = vsub.f32 %v223, %v224
          %v226 = vmax.f32 %v225, 0.0
          %v227 = vadd.f32 %v226, 1e-05
          %v228 = vrsqrt.pop %v227
          %v229 = vsub.f32 %v215, %v219
          %v230 = vmul.f32 %v229, %v228
          %231 = vst [vmem:[#allocation2] sm:$0xff] %v230
        $region36: #{prenorm_linear.1} parent=31 // pred_fallthru
          _
        %v232 = vld [vmem:[#allocation2] sm:$0xff]
        %v233 = vld [vmem:[%s207] sm:$0xff]
        %v234 = vld [vmem:[%s207 + $0x8] sm:$0xff]
        %v235 = vld [vmem:[%s207 + $0x10] sm:$0xff]
        %v236 = vld [vmem:[%s207 + $0x18] sm:$0xff]
        %v237 = vld [vmem:[%s207 + $0x20] sm:$0xff]
        %v238 = vld [vmem:[%s207 + $0x28] sm:$0xff]
        %v239 = vld [vmem:[%s207 + $0x30] sm:$0xff]
        %v240 = vld [vmem:[%s207 + $0x38] sm:$0xff]
        %v241 = vld [vmem:[%s207 + $0x40] sm:$0xff]
        %v242 = vld [vmem:[%s207 + $0x48] sm:$0xff]
        %v243 = vld [vmem:[%s207 + $0x50] sm:$0xff]
        %v244 = vld [vmem:[%s207 + $0x58] sm:$0xff]
        %v245 = vld [vmem:[%s207 + $0x60] sm:$0xff]
        %v246 = vld [vmem:[%s207 + $0x68] sm:$0xff]
        %v247 = vld [vmem:[%s207 + $0x70] sm:$0xff]
        %v248 = vld [vmem:[%s207 + $0x78] sm:$0xff]
        %v249 = vld [vmem:[%s210] sm:$0x1]
        %v251 = vlaneseq
        %v252 = vshrl.u32 %v251, 7
        %v253 = vsub.s32 0, %v252
        %v254 = vrot.slane %v249, %v253
        %256 = vmatprep.subr.mxu0 0.0
        %257 = vmatpush1.msra.mxu0 %v248
        %258 = vmatprep.subr.mxu0 0.0
        %259 = vmatpush1.msra.mxu0 %v247
        %260 = vmatprep.subr.mxu0 0.0
        %261 = vmatpush1.msra.mxu0 %v246
        %262 = vmatprep.subr.mxu0 0.0
        %263 = vmatpush1.msra.mxu0 %v245
        %264 = vmatprep.subr.mxu0 0.0
        %265 = vmatpush1.msra.mxu0 %v244
        %266 = vmatprep.subr.mxu0 0.0
        %267 = vmatpush1.msra.mxu0 %v243
        %268 = vmatprep.subr.mxu0 0.0
        %269 = vmatpush1.msra.mxu0 %v242
        %270 = vmatprep.subr.mxu0 0.0
        %271 = vmatpush1.msra.mxu0 %v241
        %272 = vmatprep.subr.mxu0 0.0
        %273 = vmatpush1.msra.mxu0 %v240
        %274 = vmatprep.subr.mxu0 0.0
        %275 = vmatpush1.msra.mxu0 %v239
        %276 = vmatprep.subr.mxu0 0.0
        %277 = vmatpush1.msra.mxu0 %v238
        %278 = vmatprep.subr.mxu0 0.0
        %279 = vmatpush1.msra.mxu0 %v237
        %280 = vmatprep.subr.mxu0 0.0
        %281 = vmatpush1.msra.mxu0 %v236
        %282 = vmatprep.subr.mxu0 0.0
        %283 = vmatpush1.msra.mxu0 %v235
        %284 = vmatprep.subr.mxu0 0.0
        %285 = vmatpush1.msra.mxu0 %v234
        %286 = vmatprep.subr.mxu0 0.0
        %287 = vmatpush1.msra.mxu0 %v233
        %288 = vmatprep.subr.mxu0 0.0
        %289 = vmatpush2.msra.mxu0 0.0
        %290 = vmatprep.subr.mxu0 0.0
        %291 = vmatpush2.msra.mxu0 0.0
        %292 = vmatprep.subr.mxu0 0.0
        %293 = vmatpush2.msra.mxu0 0.0
        %294 = vmatprep.subr.mxu0 0.0
        %295 = vmatpush2.msra.mxu0 0.0
        %296 = vmatprep.subr.mxu0 0.0
        %297 = vmatpush2.msra.mxu0 0.0
        %298 = vmatprep.subr.mxu0 0.0
        %299 = vmatpush2.msra.mxu0 0.0
        %300 = vmatprep.subr.mxu0 0.0
        %301 = vmatpush2.msra.mxu0 0.0
        %302 = vmatprep.subr.mxu0 0.0
        %303 = vmatpush2.msra.mxu0 0.0
        %304 = vmatprep.subr.mxu0 0.0
        %305 = vmatpush2.msra.mxu0 0.0
        %306 = vmatprep.subr.mxu0 0.0
        %307 = vmatpush2.msra.mxu0 0.0
        %308 = vmatprep.subr.mxu0 0.0
        %309 = vmatpush2.msra.mxu0 0.0
        %310 = vmatprep.subr.mxu0 0.0
        %311 = vmatpush2.msra.mxu0 0.0
        %312 = vmatprep.subr.mxu0 0.0
        %313 = vmatpush2.msra.mxu0 0.0
        %314 = vmatprep.subr.mxu0 0.0
        %315 = vmatpush2.msra.mxu0 0.0
        %316 = vmatprep.subr.mxu0 0.0
        %317 = vmatpush2.msra.mxu0 0.0
        %318 = vmatprep.subr.mxu0 0.0
        %319 = vmatpush2.msra.mxu0 0.0
        %320 = vmatprep.mubr.f32.mxu0 0.0
        %321 = vmatmul.mubr.f32.gmra.mxu0 %v232
        %v322 = vpop.f32.mrf.mxu0
        %v323 = vadd.f32 %v254, %v322
        %v324 = vpop.f32.mrf.mxu0
        %325 = vdwg.mxu0
        %326 = vst [vmem:[%s199] sm:$0xff] %v323
        %s327 = sand.u32 %s117, 1
        %s328 = scalar_lea.sflag [#allocation4], %s327
        %s329 = sand.u32 %s117, 1
        %s330 = smul.addr %s329, 8
        %s331 = scalar_lea.vmem [#allocation3], %s330
        // Predicated region
        $region37: #{prenorm_linear.1} parent=31 // pred_check
          %p332 = pneg %p127
        $region38: #{prenorm_linear.1} parent=31 // pred_check_branch
          %334 = sbr.rel (%p332) target = $region40
        $region39: #{prenorm_linear.1} parent=31 // pred_region
          %s336 = ssub.s32 128, 128
          %337 = vsyncadd %s328, %s336
          %s338 = sadd.s32 %s22, %s21
          %s339 = smul.addr %s338, 128
          %s340 = scalar_lea.hbm %s3, %s339
          %s342 = sshll.u32 %s331, 4
          %s343 = int_to_ptr.vmem [resolvable:$true] %s342
          %345 = dma.vmem_to_hbm [thread:$0]  %s343, 128, %s340, %s328
        $region40: #{prenorm_linear.1} parent=31 // pred_fallthru
          _
      $region32: #{prenorm_linear.1} parent=5 // pred_fallthru
        _
      %p346 = scmp.le.s32.totalorder 2, %s12
      // Predicated region
      $region41: #{prenorm_linear.1} parent=5 // pred_check
        %p347 = pneg %p346
      $region42: #{prenorm_linear.1} parent=5 // pred_check_branch
        %349 = sbr.rel (%p347) target = $region44
      $region43: #{prenorm_linear.1} parent=5 // pred_region
        %s350 = ssub.s32 %s12, 2
        // Predicated region
        $region45: #{prenorm_linear.1} parent=43 // pred_check
          %p351 = pneg %p133
        $region46: #{prenorm_linear.1} parent=43 // pred_check_branch
          %353 = sbr.rel (%p351) target = $region48
        $region47: #{prenorm_linear.1} parent=43 // pred_region
          %s354 = sand.u32 %s118, 1
          %s355 = scalar_lea.sflag [#allocation4], %s354
          %s356 = sand.u32 %s118, 1
          %s357 = smul.addr %s356, 8
          %s358 = scalar_lea.vmem [#allocation3], %s357
          %359 = dma.done %s355, 128
        $region48: #{prenorm_linear.1} parent=43 // pred_fallthru
          _
      $region44: #{prenorm_linear.1} parent=5 // pred_fallthru
        _
    $region6: #{prenorm_linear.1} parent=1 // loop_footer
      %s16 = sadd.s32 1, %s12
    $region7: #{prenorm_linear.1} parent=1 // loop_footer_branch
      %11 = sbr.rel target = $region3
    $region8: #{prenorm_linear.1} parent=1 // loop_exit
      _
    %360 = vsyncpa [#allocation4], 1
    %s361 = scalar_lea.sflag [#allocation4], 1
    %362 = vsyncpa %s361, 1

</llo_original>
